<compile_context>
chip_gen: v6e
topology: v6e:2x2x1
jax: 0.10.0
libtpu: 0.0.40
codegen_flags: <defaults>
</compile_context>

<pallas_src>
import math

import jax
import jax.numpy as jnp
from jax import lax
from jax.experimental import pallas as pl
from jax.experimental.pallas import tpu as pltpu


HEAD_DIM = 32
_VMEM_LIMIT = 32 * 1024 * 1024


def _cparams(n_grid_dims: int):
    return pltpu.CompilerParams(
        dimension_semantics=("parallel",) * n_grid_dims,
        vmem_limit_bytes=_VMEM_LIMIT)


def _apply_act(y, act: str):
    if act == "none":
        return y
    if act == "gelu":  # tanh approximation, matches nn.GELU(approximate='tanh')
        c = 0.7978845608028654  # sqrt(2/pi)
        return 0.5 * y * (1.0 + jnp.tanh(c * (y + 0.044715 * y * y * y)))
    if act == "silu":
        return y * jax.nn.sigmoid(y)
    if act == "sigmoid":
        return jax.nn.sigmoid(y)
    raise ValueError(act)


# --------------------------------------------------------------------- pallas kernels
def fused_matmul(x, w, scale, shift, act: str = "none", ln=None, residual=None):
    """y = act((maybe_LN(x) @ w) * scale + shift) [+ residual]

    x:(M,K) f32  w:(K,N)  scale/shift:(N,)  ln: optional (gamma, beta) over K,
    residual: optional (M,N) f32 added after the activation.
    Matmul operands are cast to bf16, accumulation in f32 on the MXU.
    """
    M, K = x.shape
    N = w.shape[1]
    tm = M if M <= 512 else 512
    grid_m = pl.cdiv(M, tm)
    has_ln = ln is not None
    has_res = residual is not None

    def kernel(*refs):
        it = iter(refs)
        x_ref = next(it)
        g_ref = next(it) if has_ln else None
        b_ref = next(it) if has_ln else None
        w_ref = next(it)
        s_ref = next(it)
        t_ref = next(it)
        r_ref = next(it) if has_res else None
        o_ref = next(it)

        xv = x_ref[...]
        if has_ln:
            mu = jnp.mean(xv, axis=-1, keepdims=True)
            xc = xv - mu
            var = jnp.mean(xc * xc, axis=-1, keepdims=True)
            xv = xc * lax.rsqrt(var + 1e-5) * g_ref[...] + b_ref[...]
        y = jnp.dot(xv.astype(jnp.bfloat16), w_ref[...],
                    preferred_element_type=jnp.float32)
        y = y * s_ref[...] + t_ref[...]
        y = _apply_act(y, act)
        if has_res:
            y = y + r_ref[...]
        o_ref[...] = y

    args = [x]
    in_specs = [pl.BlockSpec((tm, K), lambda i: (i, 0))]
    if has_ln:
        g, b = ln
        args += [g.reshape(1, K).astype(jnp.float32),
                 b.reshape(1, K).astype(jnp.float32)]
        in_specs += [pl.BlockSpec((1, K), lambda i: (0, 0)),
                     pl.BlockSpec((1, K), lambda i: (0, 0))]
    args += [w.astype(jnp.bfloat16),
             scale.reshape(1, N).astype(jnp.float32),
             shift.reshape(1, N).astype(jnp.float32)]
    in_specs += [pl.BlockSpec((K, N), lambda i: (0, 0)),
                 pl.BlockSpec((1, N), lambda i: (0, 0)),
                 pl.BlockSpec((1, N), lambda i: (0, 0))]
    if has_res:
        args.append(residual)
        in_specs.append(pl.BlockSpec((tm, N), lambda i: (i, 0)))

    return pl.pallas_call(
        kernel,
        out_shape=jax.ShapeDtypeStruct((M, N), jnp.float32),
        grid=(grid_m,),
        in_specs=in_specs,
        out_specs=pl.BlockSpec((tm, N), lambda i: (i, 0)),
        compiler_params=_cparams(1),
    )(*args)


def layernorm(x, gamma, beta, eps: float = 1e-5):
    """LayerNorm over the last dim.  x:(M,C)"""
    M, C = x.shape
    tm = M if M <= 512 else 512

    def kernel(x_ref, g_ref, b_ref, o_ref):
        xv = x_ref[...]
        mu = jnp.mean(xv, axis=-1, keepdims=True)
        xc = xv - mu
        var = jnp.mean(xc * xc, axis=-1, keepdims=True)
        o_ref[...] = xc * lax.rsqrt(var + eps) * g_ref[...] + b_ref[...]

    return pl.pallas_call(
        kernel,
        out_shape=jax.ShapeDtypeStruct((M, C), jnp.float32),
        grid=(pl.cdiv(M, tm),),
        in_specs=[
            pl.BlockSpec((tm, C), lambda i: (i, 0)),
            pl.BlockSpec((1, C), lambda i: (0, 0)),
            pl.BlockSpec((1, C), lambda i: (0, 0)),
        ],
        out_specs=pl.BlockSpec((tm, C), lambda i: (i, 0)),
        compiler_params=_cparams(1),
    )(x, gamma.reshape(1, C), beta.reshape(1, C))


def mean_axis1(x):
    """Mean over axis=1.  x:(B, L, C) -> (B, C).  Tiled over B (pipelined)."""
    B, L, C = x.shape

    def kernel(x_ref, o_ref):
        o_ref[...] = jnp.mean(x_ref[...], axis=1, keepdims=True)

    out = pl.pallas_call(
        kernel,
        out_shape=jax.ShapeDtypeStruct((B, 1, C), jnp.float32),
        grid=(B,),
        in_specs=[pl.BlockSpec((1, L, C), lambda b: (b, 0, 0))],
        out_specs=pl.BlockSpec((1, 1, C), lambda b: (b, 0, 0)),
        compiler_params=_cparams(1),
    )(x)
    return out[:, 0, :]


def avgpool2(x):
    """2x2 / stride-2 average pool, NHWC -> NHWC, as a tiled 4-way average kernel."""
    N, H, W_, C = x.shape
    H2, W2 = H // 2, W_ // 2
    parts = [x[:, i::2, j::2, :][:, :H2, :W2, :].reshape(-1, C)
             for i in range(2) for j in range(2)]
    M = N * H2 * W2
    tm = M if M <= 512 else 512

    def kernel(a_ref, b_ref, c_ref, d_ref, o_ref):
        o_ref[...] = 0.25 * (a_ref[...] + b_ref[...] + c_ref[...] + d_ref[...])

    out = pl.pallas_call(
        kernel,
        out_shape=jax.ShapeDtypeStruct((M, C), jnp.float32),
        grid=(pl.cdiv(M, tm),),
        in_specs=[pl.BlockSpec((tm, C), lambda i: (i, 0)) for _ in range(4)],
        out_specs=pl.BlockSpec((tm, C), lambda i: (i, 0)),
        compiler_params=_cparams(1),
    )(*parts)
    return out.reshape(N, H2, W2, C)


def dwconv_bn_gelu(taps, w_dw, scale, shift):
    """Depthwise 3x3 conv as 9-tap MAC, fused with BN affine + GELU.  Tiled over M.
    taps:(9, M, C)  w_dw:(9, C)  scale/shift:(C,)"""
    KK, M, C = taps.shape
    tm = M if M <= 512 else 512

    def kernel(x_ref, w_ref, s_ref, t_ref, o_ref):
        xv = x_ref[...]          # (9, tm, C)
        wv = w_ref[...]          # (9, 1, C)
        y = xv[0] * wv[0]
        for k in range(1, KK):
            y = y + xv[k] * wv[k]
        y = y * s_ref[...] + t_ref[...]
        o_ref[...] = _apply_act(y, "gelu")

    return pl.pallas_call(
        kernel,
        out_shape=jax.ShapeDtypeStruct((M, C), jnp.float32),
        grid=(pl.cdiv(M, tm),),
        in_specs=[
            pl.BlockSpec((KK, tm, C), lambda i: (0, i, 0)),
            pl.BlockSpec((KK, 1, C), lambda i: (0, 0, 0)),
            pl.BlockSpec((1, C), lambda i: (0, 0)),
            pl.BlockSpec((1, C), lambda i: (0, 0)),
        ],
        out_specs=pl.BlockSpec((tm, C), lambda i: (i, 0)),
        compiler_params=_cparams(1),
    )(taps, w_dw.reshape(KK, 1, C), scale.reshape(1, C), shift.reshape(1, C))


def se_gate(pooled, w1, b1, w2, b2):
    """sigmoid(silu(pooled @ w1 + b1) @ w2 + b2).  pooled:(N, H) -> (N, H)."""
    N, H = pooled.shape
    mid = w1.shape[1]

    def kernel(x_ref, w1_ref, b1_ref, w2_ref, b2_ref, o_ref):
        h = jnp.dot(x_ref[...].astype(jnp.bfloat16), w1_ref[...],
                    preferred_element_type=jnp.float32) + b1_ref[...]
        h = _apply_act(h, "silu")
        g = jnp.dot(h.astype(jnp.bfloat16), w2_ref[...],
                    preferred_element_type=jnp.float32) + b2_ref[...]
        o_ref[...] = _apply_act(g, "sigmoid")

    return pl.pallas_call(
        kernel,
        out_shape=jax.ShapeDtypeStruct((N, H), jnp.float32),
        grid=(1,),
        in_specs=[
            pl.BlockSpec((N, H), lambda i: (0, 0)),
            pl.BlockSpec((H, mid), lambda i: (0, 0)),
            pl.BlockSpec((1, mid), lambda i: (0, 0)),
            pl.BlockSpec((mid, H), lambda i: (0, 0)),
            pl.BlockSpec((1, H), lambda i: (0, 0)),
        ],
        out_specs=pl.BlockSpec((N, H), lambda i: (0, 0)),
        compiler_params=_cparams(1),
    )(pooled, w1.astype(jnp.bfloat16), b1.reshape(1, mid),
      w2.astype(jnp.bfloat16), b2.reshape(1, H))


def mbconv_tail(r, gate, w_shrink, b_shrink, shortcut):
    """out = shortcut + ((r * gate) @ w_shrink + b_shrink)
    r:(N,L,H) gate:(N,H) shortcut:(N,L,O) -> (N,L,O).  Fuses SE multiply, shrink 1x1
    conv (bias) and the MBConv residual add."""
    N, L, H = r.shape
    O = w_shrink.shape[1]
    tl = L if L <= 512 else 512

    def kernel(x_ref, g_ref, w_ref, b_ref, sc_ref, o_ref):
        xg = (x_ref[0] * g_ref[0]).astype(jnp.bfloat16)          # (tl, H)
        y = jnp.dot(xg, w_ref[...], preferred_element_type=jnp.float32) + b_ref[...]
        o_ref[0] = y + sc_ref[0]

    return pl.pallas_call(
        kernel,
        out_shape=jax.ShapeDtypeStruct((N, L, O), jnp.float32),
        grid=(N, pl.cdiv(L, tl)),
        in_specs=[
            pl.BlockSpec((1, tl, H), lambda n, l: (n, l, 0)),
            pl.BlockSpec((1, 1, H), lambda n, l: (n, 0, 0)),
            pl.BlockSpec((H, O), lambda n, l: (0, 0)),
            pl.BlockSpec((1, O), lambda n, l: (0, 0)),
            pl.BlockSpec((1, tl, O), lambda n, l: (n, l, 0)),
        ],
        out_specs=pl.BlockSpec((1, tl, O), lambda n, l: (n, l, 0)),
        compiler_params=_cparams(2),
    )(r, gate.reshape(N, 1, H), w_shrink.astype(jnp.bfloat16),
      b_shrink.reshape(1, O), shortcut)


def attention(q, k, v, bias, scale: float):
    """softmax(q@k^T * scale + bias) @ v with per-head relative bias.
    q,k,v:(Hh, NW, S, D) bf16   bias:(Hh, S, S) f32   -> (Hh, NW, S, D) f32.
    Several windows are batched per grid step; bias is selected by head via the
    BlockSpec index_map (never broadcast through HBM)."""
    Hh, NW, S, D = q.shape
    bblk = NW if NW <= 8 else 8

    def kernel(q_ref, k_ref, v_ref, b_ref, o_ref):
        s = jnp.einsum("bqd,bkd->bqk", q_ref[0], k_ref[0],
                       preferred_element_type=jnp.float32)
        s = s * scale + b_ref[0][None]
        m = jnp.max(s, axis=-1, keepdims=True)
        p = jnp.exp(s - m)
        denom = jnp.sum(p, axis=-1, keepdims=True)
        p = p * pl.reciprocal(denom, approx=True)
        o_ref[0] = jnp.einsum("bqk,bkd->bqd", p.astype(jnp.bfloat16), v_ref[0],
                              preferred_element_type=jnp.float32)

    return pl.pallas_call(
        kernel,
        out_shape=jax.ShapeDtypeStruct((Hh, NW, S, D), jnp.float32),
        grid=(Hh, pl.cdiv(NW, bblk)),
        in_specs=[
            pl.BlockSpec((1, bblk, S, D), lambda h, b: (h, b, 0, 0)),
            pl.BlockSpec((1, bblk, S, D), lambda h, b: (h, b, 0, 0)),
            pl.BlockSpec((1, bblk, S, D), lambda h, b: (h, b, 0, 0)),
            pl.BlockSpec((1, S, S), lambda h, b: (h, 0, 0)),
        ],
        out_specs=pl.BlockSpec((1, bblk, S, D), lambda h, b: (h, b, 0, 0)),
        compiler_params=_cparams(2),
    )(q, k, v, bias)


# ------------------------------------------------------------------------- JAX "glue"
def bn_fold(bn, eps: float = 1e-3):
    s = bn["gamma"] / jnp.sqrt(bn["rv"] + eps)
    t = bn["beta"] - bn["rm"] * s
    return s, t


def im2col3x3(x, w, stride: int):
    """x NHWC, w:(3,3,Cin,Cout).  Returns (patches:(M,9*Cin), w2:(9*Cin,Cout), shape).
    TODO(synk): tap construction is still materialized host-side (9x HBM traffic);
    fully fusing the shifted loads into the conv kernel is left for a later rev."""
    N, H, W_, Cin = x.shape
    Cout = w.shape[-1]
    if stride == 2:           # PyTorch module pads (0,1,0,1) when stride==2
        xp = jnp.pad(x, ((0, 0), (0, 1), (0, 1), (0, 0)))
        Ho, Wo = H // 2, W_ // 2
    else:                     # padding = (k-1)//2 = 1
        xp = jnp.pad(x, ((0, 0), (1, 1), (1, 1), (0, 0)))
        Ho, Wo = H, W_
    taps = [xp[:, kh::stride, kw::stride, :][:, :Ho, :Wo, :]
            for kh in range(3) for kw in range(3)]
    pat = jnp.stack(taps, axis=3).reshape(N * Ho * Wo, 9 * Cin)
    return pat, w.reshape(9 * Cin, Cout), (N, Ho, Wo, Cout)


def dw_taps(x, stride: int):
    """x NHWC -> (taps:(9, M, C), out_shape) for depthwise 3x3 conv."""
    N, H, W_, C = x.shape
    if stride == 2:
        xp = jnp.pad(x, ((0, 0), (0, 1), (0, 1), (0, 0)))
        Ho, Wo = H // 2, W_ // 2
    else:
        xp = jnp.pad(x, ((0, 0), (1, 1), (1, 1), (0, 0)))
        Ho, Wo = H, W_
    taps = [xp[:, kh::stride, kw::stride, :][:, :Ho, :Wo, :]
            for kh in range(3) for kw in range(3)]
    return jnp.stack(taps, axis=0).reshape(9, N * Ho * Wo, C), (N, Ho, Wo, C)


def block_part(x, size):
    N, H, W_, C = x.shape
    nH, nW = H // size, W_ // size
    x = x.reshape(N, nH, size, nW, size, C).transpose(0, 1, 3, 2, 4, 5)
    return x.reshape(N, nH * nW, size * size, C), nH, nW


def unblock_part(x, nH, nW, size):
    N, _, _, C = x.shape
    x = x.reshape(N, nH, nW, size, size, C).transpose(0, 1, 3, 2, 4, 5)
    return x.reshape(N, nH * size, nW * size, C)


def grid_part(x, size):
    N, H, W_, C = x.shape
    nH, nW = H // size, W_ // size
    x = x.reshape(N, size, nH, size, nW, C).transpose(0, 2, 4, 1, 3, 5)
    return x.reshape(N, nH * nW, size * size, C), nH, nW


def ungrid_part(x, nH, nW, size):
    N, _, _, C = x.shape
    x = x.reshape(N, nH, nW, size, size, C).transpose(0, 3, 1, 4, 2, 5)
    return x.reshape(N, size * nH, size * nW, C)


# ---------------------------------------------------------------------------- modules
def mbconv(x, p, stride: int):
    N, H, W_, Cin = x.shape
    hidden = p["expand_w"].shape[1]
    out_dim = p["shrink_w"].shape[1]

    # shortcut
    sc = x
    if stride > 1:
        sc = avgpool2(sc)
    Ns, Hs, Ws_, _ = sc.shape
    if "shortcut_w" in p:
        sc = fused_matmul(sc.reshape(-1, Cin), p["shortcut_w"],
                          jnp.ones((out_dim,), jnp.float32), p["shortcut_b"]
                          ).reshape(Ns, Hs, Ws_, out_dim)

    # residual: pre-BN folded into the expand 1x1 conv (+ expand-BN + GELU fused)
    s1, t1 = bn_fold(p["pre_bn"])
    s2, t2 = bn_fold(p["expand_bn"])
    w_exp = p["expand_w"] * s1[:, None]
    shift = (t1 @ p["expand_w"]) * s2 + t2
    r = fused_matmul(x.reshape(-1, Cin), w_exp, s2, shift, act="gelu"
                     ).reshape(N, H, W_, hidden)

    # depthwise 3x3 conv (no bias) + BN + GELU
    taps, shp = dw_taps(r, stride)
    s3, t3 = bn_fold(p["dw_bn"])
    r = dwconv_bn_gelu(taps, p["dw_w"], s3, t3).reshape(shp)
    _, Ho, Wo, _ = shp

    # squeeze-excitation gate, then fused (SE mul + shrink conv + shortcut add)
    L = Ho * Wo
    r3 = r.reshape(N, L, hidden)
    pooled = mean_axis1(r3)                                     # (N, hidden)
    gate = se_gate(pooled, p["se_w1"], p["se_b1"], p["se_w2"], p["se_b2"])
    out = mbconv_tail(r3, gate, p["shrink_w"], p["shrink_b"],
                      sc.reshape(N, L, out_dim))
    return out.reshape(N, Ho, Wo, out_dim)


def encoder_layer(x, p, ws: int):
    """x: (N, nWin, S, C) with S = ws*ws."""
    N, nWin, S, C = x.shape
    n_heads = C // HEAD_DIM
    NW = N * nWin
    ones_c = jnp.ones((C,), jnp.float32)
    flat = x.reshape(-1, C)

    # --- self attention block (LayerNorm fused into the QKV projection) ---
    w_qkv = jnp.concatenate([p["wq"], p["wk"], p["wv"]], axis=1)      # (C, 3C)
    b_qkv = jnp.concatenate([p["bq"], p["bk"], p["bv"]])              # (3C,)
    qkv = fused_matmul(flat, w_qkv, jnp.ones((3 * C,), jnp.float32), b_qkv,
                       ln=(p["sa_norm"]["g"], p["sa_norm"]["b"]))

    def split(i):   # -> head-major (n_heads, NW, S, D) bf16
        t = qkv[:, i * C:(i + 1) * C]
        t = t.reshape(NW, S, n_heads, HEAD_DIM).transpose(2, 0, 1, 3)
        return t.astype(jnp.bfloat16)

    qh, kh, vh = split(0), split(1), split(2)

    # relative position bias, shape (n_heads, S, S) -- never broadcast per window
    idx = (jnp.arange(ws)[None, :] - jnp.arange(ws)[:, None]) + ws - 1
    bias = p["attn_bias"][:, idx]                                     # (H, ws, ws, 2ws-1)
    bias = bias[..., idx]                                             # (H, ws, ws, ws, ws)
    bias = bias.transpose(0, 1, 3, 2, 4).reshape(n_heads, S, S)

    o = attention(qh, kh, vh, bias, 1.0 / math.sqrt(HEAD_DIM))
    o = o.transpose(1, 2, 0, 3).reshape(-1, C)
    x1 = fused_matmul(o, p["wo"], ones_c, p["bo"], residual=flat)     # + residual

    # --- MLP block (LayerNorm fused into expand matmul, residual into shrink) ---
    hid = p["w1"].shape[1]
    h = fused_matmul(x1, p["w1"], jnp.ones((hid,), jnp.float32), p["b1"],
                     act="gelu", ln=(p["mlp_norm"]["g"], p["mlp_norm"]["b"]))
    x2 = fused_matmul(h, p["w2"], ones_c, p["b2"], residual=x1)
    return x2.reshape(N, nWin, S, C)


def maxvit_block(x, p, ws: int):
    x = mbconv(x, p["mbconv"], p["stride"])
    xb, nH, nW = block_part(x, ws)
    xb = encoder_layer(xb, p["block_layer"], ws)
    x = unblock_part(xb, nH, nW, ws)
    xg, nH, nW = grid_part(x, ws)
    xg = encoder_layer(xg, p["grid_layer"], ws)
    x = ungrid_part(xg, nH, nW, ws)
    return x


def maxvit_forward(params, x_nchw, window_size: int = 7):
    x = jnp.transpose(x_nchw, (0, 2, 3, 1)).astype(jnp.float32)   # NCHW -> NHWC

    # stem: conv(3x3, s2, bias) + BN + GELU (fused) then conv(3x3, s1, bias)
    p = params["stem"]
    pat, w2, shp = im2col3x3(x, p["conv0_w"], stride=2)
    s, t = bn_fold(p["bn0"])
    x = fused_matmul(pat, w2, s, p["conv0_b"] * s + t, act="gelu").reshape(shp)

    pat, w2, shp = im2col3x3(x, p["conv1_w"], stride=1)
    x = fused_matmul(pat, w2, jnp.ones_like(p["conv1_b"]), p["conv1_b"]).reshape(shp)

    for stage in params["stages"]:
        for bp in stage:
            x = maxvit_block(x, bp, window_size)

    N, H, W_, C = x.shape
    pooled = mean_axis1(x.reshape(N, H * W_, C))                   # adaptive_avg_pool2d(1)
    return layernorm(pooled, params["norm"]["g"], params["norm"]["b"])


# ---------------------------------------------------------------------- init (synthetic)
def init_params(key, stem_dim, n_blocks, dims, window_size=7):
    state = {"key": key}

    def take(shape, scale=0.05):
        state["key"], sub = jax.random.split(state["key"])
        return scale * jax.random.normal(sub, shape, jnp.float32)

    def bn(c):
        return {"gamma": 1.0 + take((c,), 0.02), "beta": take((c,), 0.02),
                "rm": take((c,), 0.02), "rv": 1.0 + jnp.abs(take((c,), 0.02))}

    def ln(c):
        return {"g": 1.0 + take((c,), 0.02), "b": take((c,), 0.02)}

    def enc(d):
        h = d // HEAD_DIM
        rel = 2 * window_size - 1
        return {"sa_norm": ln(d), "attn_bias": take((h, rel, rel), 0.02),
                "wq": take((d, d)), "bq": take((d,), 0.02),
                "wk": take((d, d)), "bk": take((d,), 0.02),
                "wv": take((d, d)), "bv": take((d,), 0.02),
                "wo": take((d, d)), "bo": take((d,), 0.02),
                "mlp_norm": ln(d),
                "w1": take((d, 4 * d)), "b1": take((4 * d,), 0.02),
                "w2": take((4 * d, d)), "b2": take((d,), 0.02)}

    params = {"stem": {
        "conv0_w": take((3, 3, 3, stem_dim)), "conv0_b": take((stem_dim,), 0.02),
        "bn0": bn(stem_dim),
        "conv1_w": take((3, 3, stem_dim, stem_dim)), "conv1_b": take((stem_dim,), 0.02)}}

    in_dim = stem_dim
    stages = []
    for nb, dim in zip(n_blocks, dims):
        stage = []
        for i in range(nb):
            stride = 2 if i == 0 else 1
            hidden = dim * 4
            mb = {"pre_bn": bn(in_dim),
                  "expand_w": take((in_dim, hidden)), "expand_bn": bn(hidden),
                  "dw_w": take((9, hidden)), "dw_bn": bn(hidden),
                  "se_w1": take((hidden, hidden // 16)), "se_b1": take((hidden // 16,), 0.02),
                  "se_w2": take((hidden // 16, hidden)), "se_b2": take((hidden,), 0.02),
                  "shrink_w": take((hidden, dim)), "shrink_b": take((dim,), 0.02)}
            if dim != in_dim:
                mb["shortcut_w"] = take((in_dim, dim))
                mb["shortcut_b"] = take((dim,), 0.02)
            stage.append({"stride": stride, "mbconv": mb,
                          "block_layer": enc(dim), "grid_layer": enc(dim)})
            in_dim = dim
        stages.append(stage)
    params["stages"] = stages
    params["norm"] = ln(in_dim)
    return params


# ------------------------------------------------------------------------------- main
if __name__ == "__main__":
    key = jax.random.PRNGKey(0)
    kp, kx = jax.random.split(key)

    # Small MaxViT: stem_dim=16, one stage of one block, dim=32 (1 head of 32), window=7.
    # Input 28x28 -> stem /2 -> 14x14 -> first block stride 2 -> 7x7 (= window size).
    params = init_params(kp, stem_dim=16, n_blocks=[1], dims=[32], window_size=7)
    x = jax.random.normal(kx, (2, 3, 28, 28), jnp.float32)   # NCHW like PyTorch

    out = maxvit_forward(params, x, window_size=7)
    out = jax.block_until_ready(out)
    assert out.shape == (2, 32), out.shape
    assert bool(jnp.all(jnp.isfinite(out)))
    # TODO(synk): dropout layers are identity (p=0.0); BatchNorm is eval-mode (folded affine).
    print("KERNEL_OK")
</pallas_src>

<mosaic_0001>
module attributes {stable_mosaic.version = 11 : i64} {
  func.func @kernel(%arg0: i32, %arg1: memref<392x27xf32, #tpu.memory_space<vmem>>, %arg2: memref<27x16xbf16, #tpu.memory_space<vmem>>, %arg3: memref<1x16xf32, #tpu.memory_space<vmem>>, %arg4: memref<1x16xf32, #tpu.memory_space<vmem>>, %arg5: memref<392x16xf32, #tpu.memory_space<vmem>>) attributes {dimension_semantics = [#tpu.dimension_semantics<parallel>], iteration_bounds = array<i64: 1>, scalar_prefetch = 0 : i64, scratch_operands = 0 : i64, tpu.core_type = #tpu.core_type<tc>, window_params = [{transform_indices = @transform_0, window_bounds = array<i64: 392, 27>}, {pipeline_mode = #tpu.pipeline_mode<synchronous>, transform_indices = @transform_1, window_bounds = array<i64: 27, 16>}, {pipeline_mode = #tpu.pipeline_mode<synchronous>, transform_indices = @transform_2, window_bounds = array<i64: 1, 16>}, {pipeline_mode = #tpu.pipeline_mode<synchronous>, transform_indices = @transform_3, window_bounds = array<i64: 1, 16>}, {transform_indices = @transform_4, window_bounds = array<i64: 392, 16>}]} {
    %c0 = arith.constant 0 : index
    %c0_0 = arith.constant 0 : index
    %0 = vector.load %arg1[%c0, %c0_0] : memref<392x27xf32, #tpu.memory_space<vmem>>, vector<392x27xf32>
    %1 = arith.truncf %0 : vector<392x27xf32> to vector<392x27xbf16>
    %c0_1 = arith.constant 0 : index
    %c0_2 = arith.constant 0 : index
    %2 = vector.load %arg2[%c0_1, %c0_2] : memref<27x16xbf16, #tpu.memory_space<vmem>>, vector<27x16xbf16>
    %cst = arith.constant dense<0.000000e+00> : vector<392x16xf32>
    %3 = tpu.matmul %1, %2, %cst {dimension_numbers = #tpu.dot_dimension_numbers<[1], [0], [0], [1], [0, 0, 1, 1], [], []>} : vector<392x27xbf16>, vector<27x16xbf16>, vector<392x16xf32> -> vector<392x16xf32>
    %c0_3 = arith.constant 0 : index
    %c0_4 = arith.constant 0 : index
    %4 = vector.load %arg3[%c0_3, %c0_4] : memref<1x16xf32, #tpu.memory_space<vmem>>, vector<1x16xf32>
    %5 = vector.broadcast %4 : vector<1x16xf32> to vector<392x16xf32>
    %6 = arith.mulf %3, %5 : vector<392x16xf32>
    %c0_5 = arith.constant 0 : index
    %c0_6 = arith.constant 0 : index
    %7 = vector.load %arg4[%c0_5, %c0_6] : memref<1x16xf32, #tpu.memory_space<vmem>>, vector<1x16xf32>
    %8 = vector.broadcast %7 : vector<1x16xf32> to vector<392x16xf32>
    %9 = arith.addf %6, %8 : vector<392x16xf32>
    %cst_7 = arith.constant 5.000000e-01 : f32
    %10 = vector.broadcast %cst_7 : f32 to vector<392x16xf32>
    %11 = arith.mulf %10, %9 : vector<392x16xf32>
    %cst_8 = arith.constant 4.471500e-02 : f32
    %12 = vector.broadcast %cst_8 : f32 to vector<392x16xf32>
    %13 = arith.mulf %12, %9 : vector<392x16xf32>
    %14 = arith.mulf %13, %9 : vector<392x16xf32>
    %15 = arith.mulf %14, %9 : vector<392x16xf32>
    %16 = arith.addf %9, %15 : vector<392x16xf32>
    %cst_9 = arith.constant 0.797884583 : f32
    %17 = vector.broadcast %cst_9 : f32 to vector<392x16xf32>
    %18 = arith.mulf %17, %16 : vector<392x16xf32>
    %19 = math.tanh %18 : vector<392x16xf32>
    %cst_10 = arith.constant 1.000000e+00 : f32
    %20 = vector.broadcast %cst_10 : f32 to vector<392x16xf32>
    %21 = arith.addf %20, %19 : vector<392x16xf32>
    %22 = arith.mulf %11, %21 : vector<392x16xf32>
    %c0_11 = arith.constant 0 : index
    %c0_12 = arith.constant 0 : index
    %23 = vector.load %arg5[%c0_11, %c0_12] : memref<392x16xf32, #tpu.memory_space<vmem>>, vector<392x16xf32>
    tpu.vector_store %arg5[%c0_11, %c0_12], %22 {strides = array<i32>} : memref<392x16xf32, #tpu.memory_space<vmem>>, vector<392x16xf32>,
    return
  }
  func.func @transform_0(%arg0: i32) -> (i32, i32) {
    %c0_i32 = arith.constant 0 : i32
    %c0_i32_0 = arith.constant 0 : i32
    return %arg0, %c0_i32 : i32, i32
  }
  func.func @transform_1(%arg0: i32) -> (i32, i32) {
    %c0_i32 = arith.constant 0 : i32
    %c0_i32_0 = arith.constant 0 : i32
    %c0_i32_1 = arith.constant 0 : i32
    return %c0_i32, %c0_i32_0 : i32, i32
  }
  func.func @transform_2(%arg0: i32) -> (i32, i32) {
    %c0_i32 = arith.constant 0 : i32
    %c0_i32_0 = arith.constant 0 : i32
    %c0_i32_1 = arith.constant 0 : i32
    return %c0_i32, %c0_i32_0 : i32, i32
  }
  func.func @transform_3(%arg0: i32) -> (i32, i32) {
    %c0_i32 = arith.constant 0 : i32
    %c0_i32_0 = arith.constant 0 : i32
    %c0_i32_1 = arith.constant 0 : i32
    return %c0_i32, %c0_i32_0 : i32, i32
  }
  func.func @transform_4(%arg0: i32) -> (i32, i32) {
    %c0_i32 = arith.constant 0 : i32
    %c0_i32_0 = arith.constant 0 : i32
    return %arg0, %c0_i32 : i32, i32
  }
}

</mosaic_0001>

<llo_original>
// kernel: tpu_custom_call.1
$region0: #{tpu_custom_call.1}
  #allocation0 [shape = 'u32[]', space=smem, size = 0x4, offset = 0x4, fixed_abs, tag = 'smem constant byte address 0x4 - core index']
  #allocation1 [shape = 'u32[144,128]{1,0:T(1,128)}', space=vmem, size = 0x12000, scoped, tag = 'internal scratch']
  %s0 = inlined_call_operand.vmem [shape: f32[392,27], index: 0, kind: input, shape index: {}]
  %s1 = inlined_call_operand.vmem [shape: bf16[27,16], index: 1, kind: input, shape index: {}]
  %s2 = inlined_call_operand.vmem [shape: f32[1,16], index: 2, kind: input, shape index: {}]
  %s3 = inlined_call_operand.vmem [shape: f32[1,16], index: 3, kind: input, shape index: {}]
  %s4 = inlined_call_operand.vmem [shape: f32[392,16], index: 4, kind: output, shape index: {}]
  %s5 = sld [smem:[#allocation0]]
  $region26: #{tpu_custom_call.1} parent=0
    _
  %s7 = ssub.s32 1, %s5
  %s8 = scalar_select 0, %s7, %s5
  // Predicated region
  $region2: #{tpu_custom_call.1} parent=0 // pred_check
    _
  $region3: #{tpu_custom_call.1} parent=0 // pred_check_branch
    %10 = sbr.rel (0) target = $region5
  $region4: #{tpu_custom_call.1} parent=0 // pred_region
    _
  $region5: #{tpu_custom_call.1} parent=0 // pred_fallthru
    _
  // Predicated region
  $region6: #{tpu_custom_call.1} parent=0 // pred_check
    _
  $region7: #{tpu_custom_call.1} parent=0 // pred_check_branch
    %12 = sbr.rel (0) target = $region9
  $region8: #{tpu_custom_call.1} parent=0 // pred_region
    _
  $region9: #{tpu_custom_call.1} parent=0 // pred_fallthru
    _
  // Predicated region
  $region10: #{tpu_custom_call.1} parent=0 // pred_check
    _
  $region11: #{tpu_custom_call.1} parent=0 // pred_check_branch
    %14 = sbr.rel (0) target = $region13
  $region12: #{tpu_custom_call.1} parent=0 // pred_region
    _
  $region13: #{tpu_custom_call.1} parent=0 // pred_fallthru
    _
  // Predicated region
  $region14: #{tpu_custom_call.1} parent=0 // pred_check
    _
  $region15: #{tpu_custom_call.1} parent=0 // pred_check_branch
    %16 = sbr.rel (0) target = $region17
  $region16: #{tpu_custom_call.1} parent=0 // pred_region
    _
  $region17: #{tpu_custom_call.1} parent=0 // pred_fallthru
    _
  %v18 = vld [vmem:[%s0] sm:$0xff]
  %v19 = vld [vmem:[%s0 + $0x8] sm:$0xff]
  %v20 = vld [vmem:[%s0 + $0x10] sm:$0xff]
  %v21 = vld [vmem:[%s0 + $0x18] sm:$0xff]
  %v22 = vld [vmem:[%s0 + $0x20] sm:$0xff]
  %v23 = vld [vmem:[%s0 + $0x28] sm:$0xff]
  %v24 = vld [vmem:[%s0 + $0x30] sm:$0xff]
  %v25 = vld [vmem:[%s0 + $0x38] sm:$0xff]
  %v26 = vld [vmem:[%s0 + $0x40] sm:$0xff]
  %v27 = vld [vmem:[%s0 + $0x48] sm:$0xff]
  %v28 = vld [vmem:[%s0 + $0x50] sm:$0xff]
  %v29 = vld [vmem:[%s0 + $0x58] sm:$0xff]
  %v30 = vld [vmem:[%s0 + $0x60] sm:$0xff]
  %v31 = vld [vmem:[%s0 + $0x68] sm:$0xff]
  %v32 = vld [vmem:[%s0 + $0x70] sm:$0xff]
  %v33 = vld [vmem:[%s0 + $0x78] sm:$0xff]
  %v34 = vld [vmem:[%s0 + $0x80] sm:$0xff]
  %v35 = vld [vmem:[%s0 + $0x88] sm:$0xff]
  %v36 = vld [vmem:[%s0 + $0x90] sm:$0xff]
  %v37 = vld [vmem:[%s0 + $0x98] sm:$0xff]
  %v38 = vld [vmem:[%s0 + $0xa0] sm:$0xff]
  %v39 = vld [vmem:[%s0 + $0xa8] sm:$0xff]
  %v40 = vld [vmem:[%s0 + $0xb0] sm:$0xff]
  %v41 = vld [vmem:[%s0 + $0xb8] sm:$0xff]
  %v42 = vld [vmem:[%s0 + $0xc0] sm:$0xff]
  %v43 = vld [vmem:[%s0 + $0xc8] sm:$0xff]
  %v44 = vld [vmem:[%s0 + $0xd0] sm:$0xff]
  %v45 = vld [vmem:[%s0 + $0xd8] sm:$0xff]
  %v46 = vld [vmem:[%s0 + $0xe0] sm:$0xff]
  %v47 = vld [vmem:[%s0 + $0xe8] sm:$0xff]
  %v48 = vld [vmem:[%s0 + $0xf0] sm:$0xff]
  %v49 = vld [vmem:[%s0 + $0xf8] sm:$0xff]
  %v50 = vld [vmem:[%s0 + $0x100] sm:$0xff]
  %v51 = vld [vmem:[%s0 + $0x108] sm:$0xff]
  %v52 = vld [vmem:[%s0 + $0x110] sm:$0xff]
  %v53 = vld [vmem:[%s0 + $0x118] sm:$0xff]
  %v54 = vld [vmem:[%s0 + $0x120] sm:$0xff]
  %v55 = vld [vmem:[%s0 + $0x128] sm:$0xff]
  %v56 = vld [vmem:[%s0 + $0x130] sm:$0xff]
  %v57 = vld [vmem:[%s0 + $0x138] sm:$0xff]
  %v58 = vld [vmem:[%s0 + $0x140] sm:$0xff]
  %v59 = vld [vmem:[%s0 + $0x148] sm:$0xff]
  %v60 = vld [vmem:[%s0 + $0x150] sm:$0xff]
  %v61 = vld [vmem:[%s0 + $0x158] sm:$0xff]
  %v62 = vld [vmem:[%s0 + $0x160] sm:$0xff]
  %v63 = vld [vmem:[%s0 + $0x168] sm:$0xff]
  %v64 = vld [vmem:[%s0 + $0x170] sm:$0xff]
  %v65 = vld [vmem:[%s0 + $0x178] sm:$0xff]
  %v66 = vld [vmem:[%s0 + $0x180] sm:$0xff]
  %v67 = vpack.c.bf16 %v19, %v18
  %v68 = vpack.c.bf16 %v21, %v20
  %v69 = vpack.c.bf16 %v23, %v22
  %v70 = vpack.c.bf16 %v25, %v24
  %v71 = vpack.c.bf16 %v27, %v26
  %v72 = vpack.c.bf16 %v29, %v28
  %v73 = vpack.c.bf16 %v31, %v30
  %v74 = vpack.c.bf16 %v33, %v32
  %v75 = vpack.c.bf16 %v35, %v34
  %v76 = vpack.c.bf16 %v37, %v36
  %v77 = vpack.c.bf16 %v39, %v38
  %v78 = vpack.c.bf16 %v41, %v40
  %v79 = vpack.c.bf16 %v43, %v42
  %v80 = vpack.c.bf16 %v45, %v44
  %v81 = vpack.c.bf16 %v47, %v46
  %v82 = vpack.c.bf16 %v49, %v48
  %v83 = vpack.c.bf16 %v51, %v50
  %v84 = vpack.c.bf16 %v53, %v52
  %v85 = vpack.c.bf16 %v55, %v54
  %v86 = vpack.c.bf16 %v57, %v56
  %v87 = vpack.c.bf16 %v59, %v58
  %v88 = vpack.c.bf16 %v61, %v60
  %v89 = vpack.c.bf16 %v63, %v62
  %v90 = vpack.c.bf16 %v65, %v64
  %v91 = vpack.c.bf16 %v66, %v66
  %v92 = vld [vmem:[%s1] sm:$0xf]
  %v93 = vld [vmem:[%s1 + $0x4] sm:$0xf]
  %v94 = vld [vmem:[%s1 + $0x8] sm:$0xf]
  %v95 = vld [vmem:[%s1 + $0xc] sm:$0x3]
  %v100 = vunpack.c.l.b16 %v92
  %v101 = vunpack.c.l.b16 %v93
  %v102 = vunpack.c.l.b16 %v94
  %v103 = vunpack.c.l.b16 %v95
  %v104 = vpack.c.b16 %v101, %v100
  %v105 = vpack.c.b16 %v103, %v102
  %vm107 = vcmask 220160
  %v109 = vsel %vm107, %v67, 0
  %v112 = vsel %vm107, %v68, 0
  %v115 = vsel %vm107, %v69, 0
  %v118 = vsel %vm107, %v70, 0
  %v121 = vsel %vm107, %v71, 0
  %v124 = vsel %vm107, %v72, 0
  %v127 = vsel %vm107, %v73, 0
  %v130 = vsel %vm107, %v74, 0
  %v133 = vsel %vm107, %v75, 0
  %v136 = vsel %vm107, %v76, 0
  %v139 = vsel %vm107, %v77, 0
  %v142 = vsel %vm107, %v78, 0
  %v145 = vsel %vm107, %v79, 0
  %v148 = vsel %vm107, %v80, 0
  %v151 = vsel %vm107, %v81, 0
  %v154 = vsel %vm107, %v82, 0
  %v157 = vsel %vm107, %v83, 0
  %v160 = vsel %vm107, %v84, 0
  %v163 = vsel %vm107, %v85, 0
  %v166 = vsel %vm107, %v86, 0
  %v169 = vsel %vm107, %v87, 0
  %v172 = vsel %vm107, %v88, 0
  %v175 = vsel %vm107, %v89, 0
  %v178 = vsel %vm107, %v90, 0
  %v181 = vsel %vm107, %v91, 0
  %vm183 = vcmask 1044480
  %vm184 = vcmask 1045504
  %v185 = vsel %vm183, 4294967295, 65535
  %v186 = vsel %vm184, %v185, 0
  %v188 = vand.u32 %v105, %v186
  %190 = vmatprep.subr.bf16.mxu0 0
  %191 = vmatpush1.bf16.msra.mxu0 0
  %192 = vmatprep.subr.bf16.mxu0 0
  %193 = vmatpush1.bf16.msra.mxu0 0
  %194 = vmatprep.subr.bf16.mxu0 0
  %195 = vmatpush1.bf16.msra.mxu0 0
  %196 = vmatprep.subr.bf16.mxu0 0
  %197 = vmatpush1.bf16.msra.mxu0 0
  %198 = vmatprep.subr.bf16.mxu0 0
  %199 = vmatpush1.bf16.msra.mxu0 0
  %200 = vmatprep.subr.bf16.mxu0 0
  %201 = vmatpush1.bf16.msra.mxu0 0
  %202 = vmatprep.subr.bf16.mxu0 0
  %203 = vmatpush1.bf16.msra.mxu0 %v188
  %204 = vmatprep.subr.bf16.mxu0 0
  %205 = vmatpush1.bf16.msra.mxu0 %v104
  %206 = vmatprep.subr.bf16.mxu0 0
  %207 = vmatpush2.bf16.msra.mxu0 0
  %208 = vmatprep.subr.bf16.mxu0 0
  %209 = vmatpush2.bf16.msra.mxu0 0
  %210 = vmatprep.subr.bf16.mxu0 0
  %211 = vmatpush2.bf16.msra.mxu0 0
  %212 = vmatprep.subr.bf16.mxu0 0
  %213 = vmatpush2.bf16.msra.mxu0 0
  %214 = vmatprep.subr.bf16.mxu0 0
  %215 = vmatpush2.bf16.msra.mxu0 0
  %216 = vmatprep.subr.bf16.mxu0 0
  %217 = vmatpush2.bf16.msra.mxu0 0
  %218 = vmatprep.subr.bf16.mxu0 0
  %219 = vmatpush2.bf16.msra.mxu0 0
  %220 = vmatprep.subr.bf16.mxu0 0
  %221 = vmatpush2.bf16.msra.mxu0 0
  %222 = vmatprep.mubr.bf16.mxu0 0
  %223 = vmatmul.mubr.bf16.gmra.mxu0 %v109
  %v224 = vpop.f32.mrf.mxu0
  %v225 = vadd.f32 0.0, %v224
  %v226 = vpop.f32.mrf.mxu0
  %v227 = vpop.f32.mrf.mxu0
  %v228 = vadd.f32 0.0, %v227
  %v229 = vpop.f32.mrf.mxu0
  %230 = vmatprep.mubr.bf16.mxu0 0
  %231 = vmatmul.mubr.bf16.gmra.mxu0 %v112
  %v232 = vpop.f32.mrf.mxu0
  %v233 = vadd.f32 0.0, %v232
  %v234 = vpop.f32.mrf.mxu0
  %v235 = vpop.f32.mrf.mxu0
  %v236 = vadd.f32 0.0, %v235
  %v237 = vpop.f32.mrf.mxu0
  %238 = vmatprep.mubr.bf16.mxu0 0
  %239 = vmatmul.mubr.bf16.gmra.mxu0 %v115
  %v240 = vpop.f32.mrf.mxu0
  %v241 = vadd.f32 0.0, %v240
  %v242 = vpop.f32.mrf.mxu0
  %v243 = vpop.f32.mrf.mxu0
  %v244 = vadd.f32 0.0, %v243
  %v245 = vpop.f32.mrf.mxu0
  %246 = vmatprep.mubr.bf16.mxu0 0
  %247 = vmatmul.mubr.bf16.gmra.mxu0 %v118
  %v248 = vpop.f32.mrf.mxu0
  %v249 = vadd.f32 0.0, %v248
  %v250 = vpop.f32.mrf.mxu0
  %v251 = vpop.f32.mrf.mxu0
  %v252 = vadd.f32 0.0, %v251
  %v253 = vpop.f32.mrf.mxu0
  %254 = vmatprep.mubr.bf16.mxu0 0
  %255 = vmatmul.mubr.bf16.gmra.mxu0 %v121
  %v256 = vpop.f32.mrf.mxu0
  %v257 = vadd.f32 0.0, %v256
  %v258 = vpop.f32.mrf.mxu0
  %v259 = vpop.f32.mrf.mxu0
  %v260 = vadd.f32 0.0, %v259
  %v261 = vpop.f32.mrf.mxu0
  %262 = vmatprep.mubr.bf16.mxu0 0
  %263 = vmatmul.mubr.bf16.gmra.mxu0 %v124
  %v264 = vpop.f32.mrf.mxu0
  %v265 = vadd.f32 0.0, %v264
  %v266 = vpop.f32.mrf.mxu0
  %v267 = vpop.f32.mrf.mxu0
  %v268 = vadd.f32 0.0, %v267
  %v269 = vpop.f32.mrf.mxu0
  %270 = vmatprep.mubr.bf16.mxu0 0
  %271 = vmatmul.mubr.bf16.gmra.mxu0 %v127
  %v272 = vpop.f32.mrf.mxu0
  %v273 = vadd.f32 0.0, %v272
  %v274 = vpop.f32.mrf.mxu0
  %v275 = vpop.f32.mrf.mxu0
  %v276 = vadd.f32 0.0, %v275
  %v277 = vpop.f32.mrf.mxu0
  %278 = vmatprep.mubr.bf16.mxu0 0
  %279 = vmatmul.mubr.bf16.gmra.mxu0 %v130
  %v280 = vpop.f32.mrf.mxu0
  %v281 = vadd.f32 0.0, %v280
  %v282 = vpop.f32.mrf.mxu0
  %v283 = vpop.f32.mrf.mxu0
  %v284 = vadd.f32 0.0, %v283
  %v285 = vpop.f32.mrf.mxu0
  %286 = vmatprep.mubr.bf16.mxu0 0
  %287 = vmatmul.mubr.bf16.gmra.mxu0 %v133
  %v288 = vpop.f32.mrf.mxu0
  %v289 = vadd.f32 0.0, %v288
  %v290 = vpop.f32.mrf.mxu0
  %v291 = vpop.f32.mrf.mxu0
  %v292 = vadd.f32 0.0, %v291
  %v293 = vpop.f32.mrf.mxu0
  %294 = vmatprep.mubr.bf16.mxu0 0
  %295 = vmatmul.mubr.bf16.gmra.mxu0 %v136
  %v296 = vpop.f32.mrf.mxu0
  %v297 = vadd.f32 0.0, %v296
  %v298 = vpop.f32.mrf.mxu0
  %v299 = vpop.f32.mrf.mxu0
  %v300 = vadd.f32 0.0, %v299
  %v301 = vpop.f32.mrf.mxu0
  %302 = vmatprep.mubr.bf16.mxu0 0
  %303 = vmatmul.mubr.bf16.gmra.mxu0 %v139
  %v304 = vpop.f32.mrf.mxu0
  %v305 = vadd.f32 0.0, %v304
  %v306 = vpop.f32.mrf.mxu0
  %v307 = vpop.f32.mrf.mxu0
  %v308 = vadd.f32 0.0, %v307
  %v309 = vpop.f32.mrf.mxu0
  %310 = vmatprep.mubr.bf16.mxu0 0
  %311 = vmatmul.mubr.bf16.gmra.mxu0 %v142
  %v312 = vpop.f32.mrf.mxu0
  %v313 = vadd.f32 0.0, %v312
  %v314 = vpop.f32.mrf.mxu0
  %v315 = vpop.f32.mrf.mxu0
  %v316 = vadd.f32 0.0, %v315
  %v317 = vpop.f32.mrf.mxu0
  %318 = vmatprep.mubr.bf16.mxu0 0
  %319 = vmatmul.mubr.bf16.gmra.mxu0 %v145
  %v320 = vpop.f32.mrf.mxu0
  %v321 = vadd.f32 0.0, %v320
  %v322 = vpop.f32.mrf.mxu0
  %v323 = vpop.f32.mrf.mxu0
  %v324 = vadd.f32 0.0, %v323
  %v325 = vpop.f32.mrf.mxu0
  %326 = vmatprep.mubr.bf16.mxu0 0
  %327 = vmatmul.mubr.bf16.gmra.mxu0 %v148
  %v328 = vpop.f32.mrf.mxu0
  %v329 = vadd.f32 0.0, %v328
  %v330 = vpop.f32.mrf.mxu0
  %v331 = vpop.f32.mrf.mxu0
  %v332 = vadd.f32 0.0, %v331
  %v333 = vpop.f32.mrf.mxu0
  %334 = vmatprep.mubr.bf16.mxu0 0
  %335 = vmatmul.mubr.bf16.gmra.mxu0 %v151
  %v336 = vpop.f32.mrf.mxu0
  %v337 = vadd.f32 0.0, %v336
  %v338 = vpop.f32.mrf.mxu0
  %v339 = vpop.f32.mrf.mxu0
  %v340 = vadd.f32 0.0, %v339
  %v341 = vpop.f32.mrf.mxu0
  %342 = vmatprep.mubr.bf16.mxu0 0
  %343 = vmatmul.mubr.bf16.gmra.mxu0 %v154
  %v344 = vpop.f32.mrf.mxu0
  %v345 = vadd.f32 0.0, %v344
  %v346 = vpop.f32.mrf.mxu0
  %v347 = vpop.f32.mrf.mxu0
  %v348 = vadd.f32 0.0, %v347
  %v349 = vpop.f32.mrf.mxu0
  %350 = vmatprep.mubr.bf16.mxu0 0
  %351 = vmatmul.mubr.bf16.gmra.mxu0 %v157
  %v352 = vpop.f32.mrf.mxu0
  %v353 = vadd.f32 0.0, %v352
  %v354 = vpop.f32.mrf.mxu0
  %v355 = vpop.f32.mrf.mxu0
  %v356 = vadd.f32 0.0, %v355
  %v357 = vpop.f32.mrf.mxu0
  %358 = vmatprep.mubr.bf16.mxu0 0
  %359 = vmatmul.mubr.bf16.gmra.mxu0 %v160
  %v360 = vpop.f32.mrf.mxu0
  %v361 = vadd.f32 0.0, %v360
  %v362 = vpop.f32.mrf.mxu0
  %v363 = vpop.f32.mrf.mxu0
  %v364 = vadd.f32 0.0, %v363
  %v365 = vpop.f32.mrf.mxu0
  %366 = vmatprep.mubr.bf16.mxu0 0
  %367 = vmatmul.mubr.bf16.gmra.mxu0 %v163
  %v368 = vpop.f32.mrf.mxu0
  %v369 = vadd.f32 0.0, %v368
  %v370 = vpop.f32.mrf.mxu0
  %v371 = vpop.f32.mrf.mxu0
  %v372 = vadd.f32 0.0, %v371
  %v373 = vpop.f32.mrf.mxu0
  %374 = vmatprep.mubr.bf16.mxu0 0
  %375 = vmatmul.mubr.bf16.gmra.mxu0 %v166
  %v376 = vpop.f32.mrf.mxu0
  %v377 = vadd.f32 0.0, %v376
  %v378 = vpop.f32.mrf.mxu0
  %v379 = vpop.f32.mrf.mxu0
  %v380 = vadd.f32 0.0, %v379
  %v381 = vpop.f32.mrf.mxu0
  %382 = vmatprep.mubr.bf16.mxu0 0
  %383 = vmatmul.mubr.bf16.gmra.mxu0 %v169
  %v384 = vpop.f32.mrf.mxu0
  %v385 = vadd.f32 0.0, %v384
  %v386 = vpop.f32.mrf.mxu0
  %v387 = vpop.f32.mrf.mxu0
  %v388 = vadd.f32 0.0, %v387
  %v389 = vpop.f32.mrf.mxu0
  %390 = vmatprep.mubr.bf16.mxu0 0
  %391 = vmatmul.mubr.bf16.gmra.mxu0 %v172
  %v392 = vpop.f32.mrf.mxu0
  %v393 = vadd.f32 0.0, %v392
  %v394 = vpop.f32.mrf.mxu0
  %v395 = vpop.f32.mrf.mxu0
  %v396 = vadd.f32 0.0, %v395
  %v397 = vpop.f32.mrf.mxu0
  %398 = vmatprep.mubr.bf16.mxu0 0
  %399 = vmatmul.mubr.bf16.gmra.mxu0 %v175
  %v400 = vpop.f32.mrf.mxu0
  %v401 = vadd.f32 0.0, %v400
  %v402 = vpop.f32.mrf.mxu0
  %v403 = vpop.f32.mrf.mxu0
  %v404 = vadd.f32 0.0, %v403
  %v405 = vpop.f32.mrf.mxu0
  %406 = vmatprep.mubr.bf16.mxu0 0
  %407 = vmatmul.mubr.bf16.gmra.mxu0 %v178
  %v408 = vpop.f32.mrf.mxu0
  %v409 = vadd.f32 0.0, %v408
  %v410 = vpop.f32.mrf.mxu0
  %v411 = vpop.f32.mrf.mxu0
  %v412 = vadd.f32 0.0, %v411
  %v413 = vpop.f32.mrf.mxu0
  %414 = vmatprep.mubr.bf16.mxu0 0
  %415 = vmatmul.mubr.bf16.gmra.mxu0 %v181
  %v416 = vpop.f32.mrf.mxu0
  %v417 = vadd.f32 0.0, %v416
  %v418 = vpop.f32.mrf.mxu0
  %v419 = vpop.f32.mrf.mxu0
  %v420 = vpop.f32.mrf.mxu0
  %421 = vdwg.mxu0
  %v422 = vld [vmem:[%s2] sm:$0x1]
  %v424 = vlaneseq
  %v425 = vshrl.u32 %v424, 7
  %v426 = vsub.s32 0, %v425
  %v427 = vrot.slane %v422, %v426
  %v429 = vmul.f32 %v225, %v427
  %v430 = vmul.f32 %v228, %v427
  %v431 = vmul.f32 %v233, %v427
  %v432 = vmul.f32 %v236, %v427
  %v433 = vmul.f32 %v241, %v427
  %v434 = vmul.f32 %v244, %v427
  %v435 = vmul.f32 %v249, %v427
  %v436 = vmul.f32 %v252, %v427
  %v437 = vmul.f32 %v257, %v427
  %v438 = vmul.f32 %v260, %v427
  %v439 = vmul.f32 %v265, %v427
  %v440 = vmul.f32 %v268, %v427
  %v441 = vmul.f32 %v273, %v427
  %v442 = vmul.f32 %v276, %v427
  %v443 = vmul.f32 %v281, %v427
  %v444 = vmul.f32 %v284, %v427
  %v445 = vmul.f32 %v289, %v427
  %v446 = vmul.f32 %v292, %v427
  %v447 = vmul.f32 %v297, %v427
  %v448 = vmul.f32 %v300, %v427
  %v449 = vmul.f32 %v305, %v427
  %v450 = vmul.f32 %v308, %v427
  %v451 = vmul.f32 %v313, %v427
  %v452 = vmul.f32 %v316, %v427
  %v453 = vmul.f32 %v321, %v427
  %v454 = vmul.f32 %v324, %v427
  %v455 = vmul.f32 %v329, %v427
  %v456 = vmul.f32 %v332, %v427
  %v457 = vmul.f32 %v337, %v427
  %v458 = vmul.f32 %v340, %v427
  %v459 = vmul.f32 %v345, %v427
  %v460 = vmul.f32 %v348, %v427
  %v461 = vmul.f32 %v353, %v427
  %v462 = vmul.f32 %v356, %v427
  %v463 = vmul.f32 %v361, %v427
  %v464 = vmul.f32 %v364, %v427
  %v465 = vmul.f32 %v369, %v427
  %v466 = vmul.f32 %v372, %v427
  %v467 = vmul.f32 %v377, %v427
  %v468 = vmul.f32 %v380, %v427
  %v469 = vmul.f32 %v385, %v427
  %v470 = vmul.f32 %v388, %v427
  %v471 = vmul.f32 %v393, %v427
  %v472 = vmul.f32 %v396, %v427
  %v473 = vmul.f32 %v401, %v427
  %v474 = vmul.f32 %v404, %v427
  %v475 = vmul.f32 %v409, %v427
  %v476 = vmul.f32 %v412, %v427
  %v477 = vmul.f32 %v417, %v427
  %v478 = vld [vmem:[%s3] sm:$0x1]
  %v480 = vlaneseq
  %v481 = vshrl.u32 %v480, 7
  %v482 = vsub.s32 0, %v481
  %v483 = vrot.slane %v478, %v482
  %v485 = vadd.f32 %v429, %v483
  %v486 = vadd.f32 %v430, %v483
  %v487 = vadd.f32 %v431, %v483
  %v488 = vadd.f32 %v432, %v483
  %v489 = vadd.f32 %v433, %v483
  %v490 = vadd.f32 %v434, %v483
  %v491 = vadd.f32 %v435, %v483
  %v492 = vadd.f32 %v436, %v483
  %v493 = vadd.f32 %v437, %v483
  %v494 = vadd.f32 %v438, %v483
  %v495 = vadd.f32 %v439, %v483
  %v496 = vadd.f32 %v440, %v483
  %v497 = vadd.f32 %v441, %v483
  %v498 = vadd.f32 %v442, %v483
  %v499 = vadd.f32 %v443, %v483
  %v500 = vadd.f32 %v444, %v483
  %v501 = vadd.f32 %v445, %v483
  %v502 = vadd.f32 %v446, %v483
  %v503 = vadd.f32 %v447, %v483
  %v504 = vadd.f32 %v448, %v483
  %v505 = vadd.f32 %v449, %v483
  %v506 = vadd.f32 %v450, %v483
  %v507 = vadd.f32 %v451, %v483
  %v508 = vadd.f32 %v452, %v483
  %v509 = vadd.f32 %v453, %v483
  %v510 = vadd.f32 %v454, %v483
  %v511 = vadd.f32 %v455, %v483
  %v512 = vadd.f32 %v456, %v483
  %v513 = vadd.f32 %v457, %v483
  %v514 = vadd.f32 %v458, %v483
  %v515 = vadd.f32 %v459, %v483
  %v516 = vadd.f32 %v460, %v483
  %v517 = vadd.f32 %v461, %v483
  %v518 = vadd.f32 %v462, %v483
  %v519 = vadd.f32 %v463, %v483
  %v520 = vadd.f32 %v464, %v483
  %v521 = vadd.f32 %v465, %v483
  %v522 = vadd.f32 %v466, %v483
  %v523 = vadd.f32 %v467, %v483
  %v524 = vadd.f32 %v468, %v483
  %v525 = vadd.f32 %v469, %v483
  %v526 = vadd.f32 %v470, %v483
  %v527 = vadd.f32 %v471, %v483
  %v528 = vadd.f32 %v472, %v483
  %v529 = vadd.f32 %v473, %v483
  %v530 = vadd.f32 %v474, %v483
  %v531 = vadd.f32 %v475, %v483
  %v532 = vadd.f32 %v476, %v483
  %v533 = vadd.f32 %v477, %v483
  %v534 = vmul.f32 %v485, 0.5
  %v535 = vmul.f32 %v486, 0.5
  %v536 = vmul.f32 %v487, 0.5
  %v537 = vmul.f32 %v488, 0.5
  %v538 = vmul.f32 %v489, 0.5
  %v539 = vmul.f32 %v490, 0.5
  %v540 = vmul.f32 %v491, 0.5
  %v541 = vmul.f32 %v492, 0.5
  %v542 = vmul.f32 %v493, 0.5
  %v543 = vmul.f32 %v494, 0.5
  %v544 = vmul.f32 %v495, 0.5
  %v545 = vmul.f32 %v496, 0.5
  %v546 = vmul.f32 %v497, 0.5
  %v547 = vmul.f32 %v498, 0.5
  %v548 = vmul.f32 %v499, 0.5
  %v549 = vmul.f32 %v500, 0.5
  %v550 = vmul.f32 %v501, 0.5
  %v551 = vmul.f32 %v502, 0.5
  %v552 = vmul.f32 %v503, 0.5
  %v553 = vmul.f32 %v504, 0.5
  %v554 = vmul.f32 %v505, 0.5
  %v555 = vmul.f32 %v506, 0.5
  %v556 = vmul.f32 %v507, 0.5
  %v557 = vmul.f32 %v508, 0.5
  %v558 = vmul.f32 %v509, 0.5
  %v559 = vmul.f32 %v510, 0.5
  %v560 = vmul.f32 %v511, 0.5
  %v561 = vmul.f32 %v512, 0.5
  %v562 = vmul.f32 %v513, 0.5
  %v563 = vmul.f32 %v514, 0.5
  %v564 = vmul.f32 %v515, 0.5
  %v565 = vmul.f32 %v516, 0.5
  %v566 = vmul.f32 %v517, 0.5
  %v567 = vmul.f32 %v518, 0.5
  %v568 = vmul.f32 %v519, 0.5
  %v569 = vmul.f32 %v520, 0.5
  %v570 = vmul.f32 %v521, 0.5
  %v571 = vmul.f32 %v522, 0.5
  %v572 = vmul.f32 %v523, 0.5
  %v573 = vmul.f32 %v524, 0.5
  %v574 = vmul.f32 %v525, 0.5
  %v575 = vmul.f32 %v526, 0.5
  %v576 = vmul.f32 %v527, 0.5
  %v577 = vmul.f32 %v528, 0.5
  %v578 = vmul.f32 %v529, 0.5
  %v579 = vmul.f32 %v530, 0.5
  %v580 = vmul.f32 %v531, 0.5
  %v581 = vmul.f32 %v532, 0.5
  %v582 = vmul.f32 %v533, 0.5
  %v583 = vmul.f32 %v485, 0.044715
  %v584 = vmul.f32 %v486, 0.044715
  %v585 = vmul.f32 %v487, 0.044715
  %v586 = vmul.f32 %v488, 0.044715
  %v587 = vmul.f32 %v489, 0.044715
  %v588 = vmul.f32 %v490, 0.044715
  %v589 = vmul.f32 %v491, 0.044715
  %v590 = vmul.f32 %v492, 0.044715
  %v591 = vmul.f32 %v493, 0.044715
  %v592 = vmul.f32 %v494, 0.044715
  %v593 = vmul.f32 %v495, 0.044715
  %v594 = vmul.f32 %v496, 0.044715
  %v595 = vmul.f32 %v497, 0.044715
  %v596 = vmul.f32 %v498, 0.044715
  %v597 = vmul.f32 %v499, 0.044715
  %v598 = vmul.f32 %v500, 0.044715
  %v599 = vmul.f32 %v501, 0.044715
  %v600 = vmul.f32 %v502, 0.044715
  %v601 = vmul.f32 %v503, 0.044715
  %v602 = vmul.f32 %v504, 0.044715
  %v603 = vmul.f32 %v505, 0.044715
  %v604 = vmul.f32 %v506, 0.044715
  %v605 = vmul.f32 %v507, 0.044715
  %v606 = vmul.f32 %v508, 0.044715
  %v607 = vmul.f32 %v509, 0.044715
  %v608 = vmul.f32 %v510, 0.044715
  %v609 = vmul.f32 %v511, 0.044715
  %v610 = vmul.f32 %v512, 0.044715
  %v611 = vmul.f32 %v513, 0.044715
  %v612 = vmul.f32 %v514, 0.044715
  %v613 = vmul.f32 %v515, 0.044715
  %v614 = vmul.f32 %v516, 0.044715
  %v615 = vmul.f32 %v517, 0.044715
  %v616 = vmul.f32 %v518, 0.044715
  %v617 = vmul.f32 %v519, 0.044715
  %v618 = vmul.f32 %v520, 0.044715
  %v619 = vmul.f32 %v521, 0.044715
  %v620 = vmul.f32 %v522, 0.044715
  %v621 = vmul.f32 %v523, 0.044715
  %v622 = vmul.f32 %v524, 0.044715
  %v623 = vmul.f32 %v525, 0.044715
  %v624 = vmul.f32 %v526, 0.044715
  %v625 = vmul.f32 %v527, 0.044715
  %v626 = vmul.f32 %v528, 0.044715
  %v627 = vmul.f32 %v529, 0.044715
  %v628 = vmul.f32 %v530, 0.044715
  %v629 = vmul.f32 %v531, 0.044715
  %v630 = vmul.f32 %v532, 0.044715
  %v631 = vmul.f32 %v533, 0.044715
  %v632 = vmul.f32 %v583, %v485
  %v633 = vmul.f32 %v584, %v486
  %v634 = vmul.f32 %v585, %v487
  %v635 = vmul.f32 %v586, %v488
  %v636 = vmul.f32 %v587, %v489
  %v637 = vmul.f32 %v588, %v490
  %v638 = vmul.f32 %v589, %v491
  %v639 = vmul.f32 %v590, %v492
  %v640 = vmul.f32 %v591, %v493
  %v641 = vmul.f32 %v592, %v494
  %v642 = vmul.f32 %v593, %v495
  %v643 = vmul.f32 %v594, %v496
  %v644 = vmul.f32 %v595, %v497
  %v645 = vmul.f32 %v596, %v498
  %v646 = vmul.f32 %v597, %v499
  %v647 = vmul.f32 %v598, %v500
  %v648 = vmul.f32 %v599, %v501
  %v649 = vmul.f32 %v600, %v502
  %v650 = vmul.f32 %v601, %v503
  %v651 = vmul.f32 %v602, %v504
  %v652 = vmul.f32 %v603, %v505
  %v653 = vmul.f32 %v604, %v506
  %v654 = vmul.f32 %v605, %v507
  %v655 = vmul.f32 %v606, %v508
  %v656 = vmul.f32 %v607, %v509
  %v657 = vmul.f32 %v608, %v510
  %v658 = vmul.f32 %v609, %v511
  %v659 = vmul.f32 %v610, %v512
  %v660 = vmul.f32 %v611, %v513
  %v661 = vmul.f32 %v612, %v514
  %v662 = vmul.f32 %v613, %v515
  %v663 = vmul.f32 %v614, %v516
  %v664 = vmul.f32 %v615, %v517
  %v665 = vmul.f32 %v616, %v518
  %v666 = vmul.f32 %v617, %v519
  %v667 = vmul.f32 %v618, %v520
  %v668 = vmul.f32 %v619, %v521
  %v669 = vmul.f32 %v620, %v522
  %v670 = vmul.f32 %v621, %v523
  %v671 = vmul.f32 %v622, %v524
  %v672 = vmul.f32 %v623, %v525
  %v673 = vmul.f32 %v624, %v526
  %v674 = vmul.f32 %v625, %v527
  %v675 = vmul.f32 %v626, %v528
  %v676 = vmul.f32 %v627, %v529
  %v677 = vmul.f32 %v628, %v530
  %v678 = vmul.f32 %v629, %v531
  %v679 = vmul.f32 %v630, %v532
  %v680 = vmul.f32 %v631, %v533
  %v681 = vmul.f32 %v632, %v485
  %v682 = vmul.f32 %v633, %v486
  %v683 = vmul.f32 %v634, %v487
  %v684 = vmul.f32 %v635, %v488
  %v685 = vmul.f32 %v636, %v489
  %v686 = vmul.f32 %v637, %v490
  %v687 = vmul.f32 %v638, %v491
  %v688 = vmul.f32 %v639, %v492
  %v689 = vmul.f32 %v640, %v493
  %v690 = vmul.f32 %v641, %v494
  %v691 = vmul.f32 %v642, %v495
  %v692 = vmul.f32 %v643, %v496
  %v693 = vmul.f32 %v644, %v497
  %v694 = vmul.f32 %v645, %v498
  %v695 = vmul.f32 %v646, %v499
  %v696 = vmul.f32 %v647, %v500
  %v697 = vmul.f32 %v648, %v501
  %v698 = vmul.f32 %v649, %v502
  %v699 = vmul.f32 %v650, %v503
  %v700 = vmul.f32 %v651, %v504
  %v701 = vmul.f32 %v652, %v505
  %v702 = vmul.f32 %v653, %v506
  %v703 = vmul.f32 %v654, %v507
  %v704 = vmul.f32 %v655, %v508
  %v705 = vmul.f32 %v656, %v509
  %v706 = vmul.f32 %v657, %v510
  %v707 = vmul.f32 %v658, %v511
  %v708 = vmul.f32 %v659, %v512
  %v709 = vmul.f32 %v660, %v513
  %v710 = vmul.f32 %v661, %v514
  %v711 = vmul.f32 %v662, %v515
  %v712 = vmul.f32 %v663, %v516
  %v713 = vmul.f32 %v664, %v517
  %v714 = vmul.f32 %v665, %v518
  %v715 = vmul.f32 %v666, %v519
  %v716 = vmul.f32 %v667, %v520
  %v717 = vmul.f32 %v668, %v521
  %v718 = vmul.f32 %v669, %v522
  %v719 = vmul.f32 %v670, %v523
  %v720 = vmul.f32 %v671, %v524
  %v721 = vmul.f32 %v672, %v525
  %v722 = vmul.f32 %v673, %v526
  %v723 = vmul.f32 %v674, %v527
  %v724 = vmul.f32 %v675, %v528
  %v725 = vmul.f32 %v676, %v529
  %v726 = vmul.f32 %v677, %v530
  %v727 = vmul.f32 %v678, %v531
  %v728 = vmul.f32 %v679, %v532
  %v729 = vmul.f32 %v680, %v533
  %v730 = vadd.f32 %v485, %v681
  %v731 = vadd.f32 %v486, %v682
  %v732 = vadd.f32 %v487, %v683
  %v733 = vadd.f32 %v488, %v684
  %v734 = vadd.f32 %v489, %v685
  %v735 = vadd.f32 %v490, %v686
  %v736 = vadd.f32 %v491, %v687
  %v737 = vadd.f32 %v492, %v688
  %v738 = vadd.f32 %v493, %v689
  %v739 = vadd.f32 %v494, %v690
  %v740 = vadd.f32 %v495, %v691
  %v741 = vadd.f32 %v496, %v692
  %v742 = vadd.f32 %v497, %v693
  %v743 = vadd.f32 %v498, %v694
  %v744 = vadd.f32 %v499, %v695
  %v745 = vadd.f32 %v500, %v696
  %v746 = vadd.f32 %v501, %v697
  %v747 = vadd.f32 %v502, %v698
  %v748 = vadd.f32 %v503, %v699
  %v749 = vadd.f32 %v504, %v700
  %v750 = vadd.f32 %v505, %v701
  %v751 = vadd.f32 %v506, %v702
  %v752 = vadd.f32 %v507, %v703
  %v753 = vadd.f32 %v508, %v704
  %v754 = vadd.f32 %v509, %v705
  %v755 = vadd.f32 %v510, %v706
  %v756 = vadd.f32 %v511, %v707
  %v757 = vadd.f32 %v512, %v708
  %v758 = vadd.f32 %v513, %v709
  %v759 = vadd.f32 %v514, %v710
  %v760 = vadd.f32 %v515, %v711
  %v761 = vadd.f32 %v516, %v712
  %v762 = vadd.f32 %v517, %v713
  %v763 = vadd.f32 %v518, %v714
  %v764 = vadd.f32 %v519, %v715
  %v765 = vadd.f32 %v520, %v716
  %v766 = vadd.f32 %v521, %v717
  %v767 = vadd.f32 %v522, %v718
  %v768 = vadd.f32 %v523, %v719
  %v769 = vadd.f32 %v524, %v720
  %v770 = vadd.f32 %v525, %v721
  %v771 = vadd.f32 %v526, %v722
  %v772 = vadd.f32 %v527, %v723
  %v773 = vadd.f32 %v528, %v724
  %v774 = vadd.f32 %v529, %v725
  %v775 = vadd.f32 %v530, %v726
  %v776 = vadd.f32 %v531, %v727
  %v777 = vadd.f32 %v532, %v728
  %v778 = vadd.f32 %v533, %v729
  %v779 = vmul.f32 %v730, 0.7978846
  %v780 = vmul.f32 %v731, 0.7978846
  %v781 = vmul.f32 %v732, 0.7978846
  %v782 = vmul.f32 %v733, 0.7978846
  %v783 = vmul.f32 %v734, 0.7978846
  %v784 = vmul.f32 %v735, 0.7978846
  %v785 = vmul.f32 %v736, 0.7978846
  %v786 = vmul.f32 %v737, 0.7978846
  %v787 = vmul.f32 %v738, 0.7978846
  %v788 = vmul.f32 %v739, 0.7978846
  %v789 = vmul.f32 %v740, 0.7978846
  %v790 = vmul.f32 %v741, 0.7978846
  %v791 = vmul.f32 %v742, 0.7978846
  %v792 = vmul.f32 %v743, 0.7978846
  %v793 = vmul.f32 %v744, 0.7978846
  %v794 = vmul.f32 %v745, 0.7978846
  %v795 = vmul.f32 %v746, 0.7978846
  %v796 = vmul.f32 %v747, 0.7978846
  %v797 = vmul.f32 %v748, 0.7978846
  %v798 = vmul.f32 %v749, 0.7978846
  %v799 = vmul.f32 %v750, 0.7978846
  %v800 = vmul.f32 %v751, 0.7978846
  %v801 = vmul.f32 %v752, 0.7978846
  %v802 = vmul.f32 %v753, 0.7978846
  %v803 = vmul.f32 %v754, 0.7978846
  %v804 = vmul.f32 %v755, 0.7978846
  %v805 = vmul.f32 %v756, 0.7978846
  %v806 = vmul.f32 %v757, 0.7978846
  %v807 = vmul.f32 %v758, 0.7978846
  %v808 = vmul.f32 %v759, 0.7978846
  %v809 = vmul.f32 %v760, 0.7978846
  %v810 = vmul.f32 %v761, 0.7978846
  %v811 = vmul.f32 %v762, 0.7978846
  %v812 = vmul.f32 %v763, 0.7978846
  %v813 = vmul.f32 %v764, 0.7978846
  %v814 = vmul.f32 %v765, 0.7978846
  %v815 = vmul.f32 %v766, 0.7978846
  %v816 = vmul.f32 %v767, 0.7978846
  %v817 = vmul.f32 %v768, 0.7978846
  %v818 = vmul.f32 %v769, 0.7978846
  %v819 = vmul.f32 %v770, 0.7978846
  %v820 = vmul.f32 %v771, 0.7978846
  %v821 = vmul.f32 %v772, 0.7978846
  %v822 = vmul.f32 %v773, 0.7978846
  %v823 = vmul.f32 %v774, 0.7978846
  %v824 = vmul.f32 %v775, 0.7978846
  %v825 = vmul.f32 %v776, 0.7978846
  %v826 = vmul.f32 %v777, 0.7978846
  %v827 = vmul.f32 %v778, 0.7978846
  %v828 = vtanh.pop %v779
  %v829 = vtanh.pop %v780
  %v830 = vtanh.pop %v781
  %v831 = vtanh.pop %v782
  %v832 = vtanh.pop %v783
  %v833 = vtanh.pop %v784
  %v834 = vtanh.pop %v785
  %v835 = vtanh.pop %v786
  %v836 = vtanh.pop %v787
  %v837 = vtanh.pop %v788
  %v838 = vtanh.pop %v789
  %v839 = vtanh.pop %v790
  %v840 = vtanh.pop %v791
  %v841 = vtanh.pop %v792
  %v842 = vtanh.pop %v793
  %v843 = vtanh.pop %v794
  %v844 = vtanh.pop %v795
  %v845 = vtanh.pop %v796
  %v846 = vtanh.pop %v797
  %v847 = vtanh.pop %v798
  %v848 = vtanh.pop %v799
  %v849 = vtanh.pop %v800
  %v850 = vtanh.pop %v801
  %v851 = vtanh.pop %v802
  %v852 = vtanh.pop %v803
  %v853 = vtanh.pop %v804
  %v854 = vtanh.pop %v805
  %v855 = vtanh.pop %v806
  %v856 = vtanh.pop %v807
  %v857 = vtanh.pop %v808
  %v858 = vtanh.pop %v809
  %v859 = vtanh.pop %v810
  %v860 = vtanh.pop %v811
  %v861 = vtanh.pop %v812
  %v862 = vtanh.pop %v813
  %v863 = vtanh.pop %v814
  %v864 = vtanh.pop %v815
  %v865 = vtanh.pop %v816
  %v866 = vtanh.pop %v817
  %v867 = vtanh.pop %v818
  %v868 = vtanh.pop %v819
  %v869 = vtanh.pop %v820
  %v870 = vtanh.pop %v821
  %v871 = vtanh.pop %v822
  %v872 = vtanh.pop %v823
  %v873 = vtanh.pop %v824
  %v874 = vtanh.pop %v825
  %v875 = vtanh.pop %v826
  %v876 = vtanh.pop %v827
  %v877 = vadd.f32 %v828, 1.0
  %v878 = vadd.f32 %v829, 1.0
  %v879 = vadd.f32 %v830, 1.0
  %v880 = vadd.f32 %v831, 1.0
  %v881 = vadd.f32 %v832, 1.0
  %v882 = vadd.f32 %v833, 1.0
  %v883 = vadd.f32 %v834, 1.0
  %v884 = vadd.f32 %v835, 1.0
  %v885 = vadd.f32 %v836, 1.0
  %v886 = vadd.f32 %v837, 1.0
  %v887 = vadd.f32 %v838, 1.0
  %v888 = vadd.f32 %v839, 1.0
  %v889 = vadd.f32 %v840, 1.0
  %v890 = vadd.f32 %v841, 1.0
  %v891 = vadd.f32 %v842, 1.0
  %v892 = vadd.f32 %v843, 1.0
  %v893 = vadd.f32 %v844, 1.0
  %v894 = vadd.f32 %v845, 1.0
  %v895 = vadd.f32 %v846, 1.0
  %v896 = vadd.f32 %v847, 1.0
  %v897 = vadd.f32 %v848, 1.0
  %v898 = vadd.f32 %v849, 1.0
  %v899 = vadd.f32 %v850, 1.0
  %v900 = vadd.f32 %v851, 1.0
  %v901 = vadd.f32 %v852, 1.0
  %v902 = vadd.f32 %v853, 1.0
  %v903 = vadd.f32 %v854, 1.0
  %v904 = vadd.f32 %v855, 1.0
  %v905 = vadd.f32 %v856, 1.0
  %v906 = vadd.f32 %v857, 1.0
  %v907 = vadd.f32 %v858, 1.0
  %v908 = vadd.f32 %v859, 1.0
  %v909 = vadd.f32 %v860, 1.0
  %v910 = vadd.f32 %v861, 1.0
  %v911 = vadd.f32 %v862, 1.0
  %v912 = vadd.f32 %v863, 1.0
  %v913 = vadd.f32 %v864, 1.0
  %v914 = vadd.f32 %v865, 1.0
  %v915 = vadd.f32 %v866, 1.0
  %v916 = vadd.f32 %v867, 1.0
  %v917 = vadd.f32 %v868, 1.0
  %v918 = vadd.f32 %v869, 1.0
  %v919 = vadd.f32 %v870, 1.0
  %v920 = vadd.f32 %v871, 1.0
  %v921 = vadd.f32 %v872, 1.0
  %v922 = vadd.f32 %v873, 1.0
  %v923 = vadd.f32 %v874, 1.0
  %v924 = vadd.f32 %v875, 1.0
  %v925 = vadd.f32 %v876, 1.0
  %v926 = vmul.f32 %v534, %v877
  %v927 = vmul.f32 %v535, %v878
  %v928 = vmul.f32 %v536, %v879
  %v929 = vmul.f32 %v537, %v880
  %v930 = vmul.f32 %v538, %v881
  %v931 = vmul.f32 %v539, %v882
  %v932 = vmul.f32 %v540, %v883
  %v933 = vmul.f32 %v541, %v884
  %v934 = vmul.f32 %v542, %v885
  %v935 = vmul.f32 %v543, %v886
  %v936 = vmul.f32 %v544, %v887
  %v937 = vmul.f32 %v545, %v888
  %v938 = vmul.f32 %v546, %v889
  %v939 = vmul.f32 %v547, %v890
  %v940 = vmul.f32 %v548, %v891
  %v941 = vmul.f32 %v549, %v892
  %v942 = vmul.f32 %v550, %v893
  %v943 = vmul.f32 %v551, %v894
  %v944 = vmul.f32 %v552, %v895
  %v945 = vmul.f32 %v553, %v896
  %v946 = vmul.f32 %v554, %v897
  %v947 = vmul.f32 %v555, %v898
  %v948 = vmul.f32 %v556, %v899
  %v949 = vmul.f32 %v557, %v900
  %v950 = vmul.f32 %v558, %v901
  %v951 = vmul.f32 %v559, %v902
  %v952 = vmul.f32 %v560, %v903
  %v953 = vmul.f32 %v561, %v904
  %v954 = vmul.f32 %v562, %v905
  %v955 = vmul.f32 %v563, %v906
  %v956 = vmul.f32 %v564, %v907
  %v957 = vmul.f32 %v565, %v908
  %v958 = vmul.f32 %v566, %v909
  %v959 = vmul.f32 %v567, %v910
  %v960 = vmul.f32 %v568, %v911
  %v961 = vmul.f32 %v569, %v912
  %v962 = vmul.f32 %v570, %v913
  %v963 = vmul.f32 %v571, %v914
  %v964 = vmul.f32 %v572, %v915
  %v965 = vmul.f32 %v573, %v916
  %v966 = vmul.f32 %v574, %v917
  %v967 = vmul.f32 %v575, %v918
  %v968 = vmul.f32 %v576, %v919
  %v969 = vmul.f32 %v577, %v920
  %v970 = vmul.f32 %v578, %v921
  %v971 = vmul.f32 %v579, %v922
  %v972 = vmul.f32 %v580, %v923
  %v973 = vmul.f32 %v581, %v924
  %v974 = vmul.f32 %v582, %v925
  %vm975 = vcmask 130048
  %976 = vst.msk [vmem:[%s4] sm:$0xff] %vm975, %v926
  %977 = vst.msk [vmem:[%s4 + $0x8] sm:$0xff] %vm975, %v927
  %978 = vst.msk [vmem:[%s4 + $0x10] sm:$0xff] %vm975, %v928
  %979 = vst.msk [vmem:[%s4 + $0x18] sm:$0xff] %vm975, %v929
  %980 = vst.msk [vmem:[%s4 + $0x20] sm:$0xff] %vm975, %v930
  %981 = vst.msk [vmem:[%s4 + $0x28] sm:$0xff] %vm975, %v931
  %982 = vst.msk [vmem:[%s4 + $0x30] sm:$0xff] %vm975, %v932
  %983 = vst.msk [vmem:[%s4 + $0x38] sm:$0xff] %vm975, %v933
  %984 = vst.msk [vmem:[%s4 + $0x40] sm:$0xff] %vm975, %v934
  %985 = vst.msk [vmem:[%s4 + $0x48] sm:$0xff] %vm975, %v935
  %986 = vst.msk [vmem:[%s4 + $0x50] sm:$0xff] %vm975, %v936
  %987 = vst.msk [vmem:[%s4 + $0x58] sm:$0xff] %vm975, %v937
  %988 = vst.msk [vmem:[%s4 + $0x60] sm:$0xff] %vm975, %v938
  %989 = vst.msk [vmem:[%s4 + $0x68] sm:$0xff] %vm975, %v939
  %990 = vst.msk [vmem:[%s4 + $0x70] sm:$0xff] %vm975, %v940
  %991 = vst.msk [vmem:[%s4 + $0x78] sm:$0xff] %vm975, %v941
  %992 = vst.msk [vmem:[%s4 + $0x80] sm:$0xff] %vm975, %v942
  %993 = vst.msk [vmem:[%s4 + $0x88] sm:$0xff] %vm975, %v943
  %994 = vst.msk [vmem:[%s4 + $0x90] sm:$0xff] %vm975, %v944
  %995 = vst.msk [vmem:[%s4 + $0x98] sm:$0xff] %vm975, %v945
  %996 = vst.msk [vmem:[%s4 + $0xa0] sm:$0xff] %vm975, %v946
  %997 = vst.msk [vmem:[%s4 + $0xa8] sm:$0xff] %vm975, %v947
  %998 = vst.msk [vmem:[%s4 + $0xb0] sm:$0xff] %vm975, %v948
  %999 = vst.msk [vmem:[%s4 + $0xb8] sm:$0xff] %vm975, %v949
  %1000 = vst.msk [vmem:[%s4 + $0xc0] sm:$0xff] %vm975, %v950
  %1001 = vst.msk [vmem:[%s4 + $0xc8] sm:$0xff] %vm975, %v951
  %1002 = vst.msk [vmem:[%s4 + $0xd0] sm:$0xff] %vm975, %v952
  %1003 = vst.msk [vmem:[%s4 + $0xd8] sm:$0xff] %vm975, %v953
  %1004 = vst.msk [vmem:[%s4 + $0xe0] sm:$0xff] %vm975, %v954
  %1005 = vst.msk [vmem:[%s4 + $0xe8] sm:$0xff] %vm975, %v955
  %1006 = vst.msk [vmem:[%s4 + $0xf0] sm:$0xff] %vm975, %v956
  %1007 = vst.msk [vmem:[%s4 + $0xf8] sm:$0xff] %vm975, %v957
  %1008 = vst.msk [vmem:[%s4 + $0x100] sm:$0xff] %vm975, %v958
  %1009 = vst.msk [vmem:[%s4 + $0x108] sm:$0xff] %vm975, %v959
  %1010 = vst.msk [vmem:[%s4 + $0x110] sm:$0xff] %vm975, %v960
  %1011 = vst.msk [vmem:[%s4 + $0x118] sm:$0xff] %vm975, %v961
  %1012 = vst.msk [vmem:[%s4 + $0x120] sm:$0xff] %vm975, %v962
  %1013 = vst.msk [vmem:[%s4 + $0x128] sm:$0xff] %vm975, %v963
  %1014 = vst.msk [vmem:[%s4 + $0x130] sm:$0xff] %vm975, %v964
  %1015 = vst.msk [vmem:[%s4 + $0x138] sm:$0xff] %vm975, %v965
  %1016 = vst.msk [vmem:[%s4 + $0x140] sm:$0xff] %vm975, %v966
  %1017 = vst.msk [vmem:[%s4 + $0x148] sm:$0xff] %vm975, %v967
  %1018 = vst.msk [vmem:[%s4 + $0x150] sm:$0xff] %vm975, %v968
  %1019 = vst.msk [vmem:[%s4 + $0x158] sm:$0xff] %vm975, %v969
  %1020 = vst.msk [vmem:[%s4 + $0x160] sm:$0xff] %vm975, %v970
  %1021 = vst.msk [vmem:[%s4 + $0x168] sm:$0xff] %vm975, %v971
  %1022 = vst.msk [vmem:[%s4 + $0x170] sm:$0xff] %vm975, %v972
  %1023 = vst.msk [vmem:[%s4 + $0x178] sm:$0xff] %vm975, %v973
  %1024 = vst.msk [vmem:[%s4 + $0x180] sm:$0xff] %vm975, %v974
  // Predicated region
  $region18: #{tpu_custom_call.1} parent=0 // pred_check
    _
  $region19: #{tpu_custom_call.1} parent=0 // pred_check_branch
    %1026 = sbr.rel (0) target = $region21
  $region20: #{tpu_custom_call.1} parent=0 // pred_region
    _
  $region21: #{tpu_custom_call.1} parent=0 // pred_fallthru
    _
  // Predicated region
  $region22: #{tpu_custom_call.1} parent=0 // pred_check
    _
  $region23: #{tpu_custom_call.1} parent=0 // pred_check_branch
    %1028 = sbr.rel (0) target = $region25
  $region24: #{tpu_custom_call.1} parent=0 // pred_region
    _
  $region25: #{tpu_custom_call.1} parent=0 // pred_fallthru
    _

</llo_original>
